<compile_context>
chip_gen: v7x
topology: tpu7x:2x2x1
jax: 0.10.0
libtpu: 0.0.40
codegen_flags: <defaults>
</compile_context>

<pallas_src>
import jax
import jax.numpy as jnp
import numpy as np
from jax.experimental import pallas as pl
from jax.experimental.pallas import tpu as pltpu


# ----------------------------------------------------------------------------
# In-kernel building blocks
# ----------------------------------------------------------------------------
def _lstm_elementwise(gates, c_prev, H):
    """gates: (B, 4H) f32 in PyTorch order [i, f, g, o]; c_prev: (B, H) f32."""
    # Full-width transcendentals (2 EUP passes over the whole 4H lane row).
    sg = jax.nn.sigmoid(gates)
    tg = jnp.tanh(gates)
    i = sg[:, 0 * H:1 * H]
    f = sg[:, 1 * H:2 * H]
    g = tg[:, 2 * H:3 * H]
    o = sg[:, 3 * H:4 * H]
    c_new = f * c_prev + i * g
    h_new = o * jnp.tanh(c_new)
    return h_new, c_new


# ----------------------------------------------------------------------------
# Fused autoregressive rollout kernel: T decoder steps, single grid point.
# The prediction is fed back as the next step's coordinate input.
# ----------------------------------------------------------------------------
def rollout_kernel(x0_ref, hc_ref,
                   w0_ref, b0_ref, wih1_ref, whh1_ref, b1_ref,
                   wpred_ref, bpred_ref,
                   pred_seq_ref, hc_out_ref):
    n_steps, B, P = pred_seq_ref.shape
    H = hc_ref.shape[-1] // 4

    # ---- hoisted once per rollout: weight loads + bias broadcasts ----------
    w0 = w0_ref[...]          # (P + H, 4H) bf16  (emb folded, x rows padded)
    wih1 = wih1_ref[...]      # (H, 4H) bf16
    whh1 = whh1_ref[...]      # (H, 4H) bf16
    wpred = wpred_ref[...]    # (H, P)  bf16 (cols >= D are zero)
    b0 = jnp.broadcast_to(b0_ref[...], (B, 4 * H))
    b1 = jnp.broadcast_to(b1_ref[...], (B, 4 * H))
    bpred = jnp.broadcast_to(bpred_ref[...], (B, P))

    # ---- lane-dense recurrent state, carried in vregs across steps ---------
    hc = hc_ref[...]                               # (B, 4H) = [h0 | h1 | c0 | c1]
    h0 = hc[:, 0 * H:1 * H]
    h1 = hc[:, 1 * H:2 * H]
    c0 = hc[:, 2 * H:3 * H]
    c1 = hc[:, 3 * H:4 * H]
    x = x0_ref[...]                                # (B, P) f32, lanes >= D are 0

    # Fully-unrolled in-kernel autoregressive loop (no grid, no per-step
    # pipeline bookkeeping, no per-step weight reload or output DMA).
    # TODO(synk): for very large n_steps switch to lax.fori_loop(..., unroll=True).
    for t in range(n_steps):
        # Layer-1 recurrent contribution is independent of this step's layer-0
        # output -> overlaps with layer-0 work (off the serialized chain).
        rec1 = jnp.dot(h1.astype(jnp.bfloat16), whh1,
                       preferred_element_type=jnp.float32)

        # Layer 0 (coordinate2emb folded into w0): input and recurrent matmuls
        # fused into one dot; concat boundary sits exactly on lane 128.
        xh = jnp.concatenate([x, h0], axis=-1).astype(jnp.bfloat16)   # (B, P+H)
        gates0 = jnp.dot(xh, w0, preferred_element_type=jnp.float32) + b0
        h0, c0 = _lstm_elementwise(gates0, c0, H)

        # Layer 1: only the input matmul remains on the critical path.
        gates1 = (jnp.dot(h0.astype(jnp.bfloat16), wih1,
                          preferred_element_type=jnp.float32) + rec1 + b1)
        h1, c1 = _lstm_elementwise(gates1, c1, H)

        # hid2coordinate: lane-dense padded prediction (cols >= D exactly 0).
        pred = (jnp.dot(h1.astype(jnp.bfloat16), wpred,
                        preferred_element_type=jnp.float32) + bpred)
        pred_seq_ref[t] = pred          # static index into the resident block
        x = pred                        # autoregressive feedback, no slicing

    # Final state written once, lane-dense [h0 | h1 | c0 | c1].
    hc_out_ref[...] = jnp.concatenate([h0, h1, c0, c1], axis=-1)


# ----------------------------------------------------------------------------
# Wrappers
# ----------------------------------------------------------------------------
def conditional_seq_decoder_rollout(init, hidden, cell, kp, output_dim, n_steps):
    """T autoregressive decoder steps in ONE pallas_call (single grid point)."""
    B, D = init.shape
    n_layers, _, H = hidden.shape
    assert n_layers == 2, "kernel is specialized for n_layers=2"
    P = kp["w_pred"].shape[-1]                      # lane-dense coordinate width
    Bp = ((max(B, 8) + 7) // 8) * 8                 # fill all 8 f32 sublanes

    # Lane-dense, sublane-padded kernel inputs.
    x0 = jnp.zeros((Bp, P), jnp.float32).at[:B, :D].set(init)
    hc = jnp.zeros((Bp, 4 * H), jnp.float32)
    hc = (hc.at[:B, 0 * H:1 * H].set(hidden[0])
            .at[:B, 1 * H:2 * H].set(hidden[1])
            .at[:B, 2 * H:3 * H].set(cell[0])
            .at[:B, 3 * H:4 * H].set(cell[1]))

    vmem = pl.BlockSpec(memory_space=pltpu.MemorySpace.VMEM)
    preds_pad, hc_out = pl.pallas_call(
        rollout_kernel,
        out_shape=(
            jax.ShapeDtypeStruct((n_steps, Bp, P), jnp.float32),  # padded preds
            jax.ShapeDtypeStruct((Bp, 4 * H), jnp.float32),       # [h0|h1|c0|c1]
        ),
        in_specs=[vmem] * 9,
        out_specs=(vmem, vmem),
    )(x0, hc,
      kp["w0_cat"], kp["b0"], kp["w_ih1"], kp["w_hh1"], kp["b1"],
      kp["w_pred"], kp["b_pred"])

    preds = preds_pad[:, :B, :output_dim]
    h_out = jnp.stack([hc_out[:B, 0 * H:1 * H], hc_out[:B, 1 * H:2 * H]])
    c_out = jnp.stack([hc_out[:B, 2 * H:3 * H], hc_out[:B, 3 * H:4 * H]])
    return preds, h_out, c_out


def conditional_seq_decoder(init, hidden, cell, kp, output_dim):
    """Single decoder step (== PyTorch module forward)."""
    preds, h_out, c_out = conditional_seq_decoder_rollout(
        init, hidden, cell, kp, output_dim, n_steps=1)
    return preds[0], h_out, c_out


# ----------------------------------------------------------------------------
# Parameters (PyTorch layout) and host-side packing / fusion for the kernel
# ----------------------------------------------------------------------------
def make_raw_params(key, output_dim, embedding_dim, hidden_dim):
    """Deterministic synthetic parameters, PyTorch layout: Linear (out, in),
    LSTM W_ih/W_hh (4H, in)."""
    H, E, D = hidden_dim, embedding_dim, output_dim
    ks = jax.random.split(key, 12)

    def rnd(k, shape, scale=0.1):
        return (scale * jax.random.normal(k, shape)).astype(jnp.float32)

    return {
        "w_emb": rnd(ks[0], (E, D)), "b_emb": rnd(ks[1], (E,)),
        "w_ih0": rnd(ks[2], (4 * H, E)), "w_hh0": rnd(ks[3], (4 * H, H)),
        "b_ih0": rnd(ks[4], (4 * H,)), "b_hh0": rnd(ks[5], (4 * H,)),
        "w_ih1": rnd(ks[6], (4 * H, H)), "w_hh1": rnd(ks[7], (4 * H, H)),
        "b_ih1": rnd(ks[8], (4 * H,)), "b_hh1": rnd(ks[9], (4 * H,)),
        "w_pred": rnd(ks[10], (D, H)), "b_pred": rnd(ks[11], (D,)),
    }


def pack_params(raw):
    """Fold coordinate2emb into layer-0, fuse layer-0 input/recurrent weights,
    zero-pad the x rows to 128 lanes (so the padded prediction feeds back with
    no slicing), pad the prediction head to a lane-dense 128-wide output, cast
    MXU weights to bf16."""
    E, D = raw["w_emb"].shape
    H = raw["w_hh0"].shape[1]
    P = max(128, ((D + 127) // 128) * 128)

    w_emb_t = raw["w_emb"].T                  # (D, E)
    w_ih0_t = raw["w_ih0"].T                  # (E, 4H)
    w_hh0_t = raw["w_hh0"].T                  # (H, 4H)

    # coordinate2emb folded into layer-0 (eval mode: dropout is identity).
    w_x0 = w_emb_t @ w_ih0_t                                     # (D, 4H)
    b0 = raw["b_emb"] @ w_ih0_t + raw["b_ih0"] + raw["b_hh0"]    # (4H,)

    # Zero-pad x rows to P: padded pred lanes hit zero rows, and the in-kernel
    # concat boundary lands at lane 128.  Sublane extent P + H (=160 for H=32)
    # is a clean bf16 packing multiple (v5e-friendly).
    w_x0_pad = jnp.zeros((P, 4 * H), jnp.float32).at[:D].set(w_x0)
    w0_cat = jnp.concatenate([w_x0_pad, w_hh0_t], axis=0)        # (P+H, 4H)

    w_pred_pad = jnp.zeros((H, P), jnp.float32).at[:, :D].set(raw["w_pred"].T)
    b_pred_pad = jnp.zeros((P,), jnp.float32).at[:D].set(raw["b_pred"])

    return {
        "w0_cat": w0_cat.astype(jnp.bfloat16),
        "b0": b0.reshape(1, 4 * H).astype(jnp.float32),
        "w_ih1": raw["w_ih1"].T.astype(jnp.bfloat16),
        "w_hh1": raw["w_hh1"].T.astype(jnp.bfloat16),
        "b1": (raw["b_ih1"] + raw["b_hh1"]).reshape(1, 4 * H).astype(jnp.float32),
        "w_pred": w_pred_pad.astype(jnp.bfloat16),
        "b_pred": b_pred_pad.reshape(1, P).astype(jnp.float32),
    }


# ----------------------------------------------------------------------------
# Pure-JAX f32 references (module semantics, eval mode)
# ----------------------------------------------------------------------------
def reference_forward(init, hidden, cell, raw):
    H = hidden.shape[-1]
    emb = init @ raw["w_emb"].T + raw["b_emb"]

    def step(x, h, c, w_ih, w_hh, b_ih, b_hh):
        gates = x @ w_ih.T + h @ w_hh.T + b_ih + b_hh
        i = jax.nn.sigmoid(gates[:, :H])
        f = jax.nn.sigmoid(gates[:, H:2 * H])
        g = jnp.tanh(gates[:, 2 * H:3 * H])
        o = jax.nn.sigmoid(gates[:, 3 * H:])
        c_new = f * c + i * g
        return o * jnp.tanh(c_new), c_new

    h0, c0 = step(emb, hidden[0], cell[0],
                  raw["w_ih0"], raw["w_hh0"], raw["b_ih0"], raw["b_hh0"])
    h1, c1 = step(h0, hidden[1], cell[1],
                  raw["w_ih1"], raw["w_hh1"], raw["b_ih1"], raw["b_hh1"])
    pred = h1 @ raw["w_pred"].T + raw["b_pred"]
    return pred, jnp.stack([h0, h1]), jnp.stack([c0, c1])


def reference_rollout(init, hidden, cell, raw, n_steps):
    x, h, c = init, hidden, cell
    preds = []
    for _ in range(n_steps):
        pred, h, c = reference_forward(x, h, c, raw)
        preds.append(pred)
        x = pred
    return jnp.stack(preds), h, c


# ----------------------------------------------------------------------------
if __name__ == "__main__":
    B = 2             # batch
    output_dim = 4    # coordinate dim
    embedding_dim = 16
    hidden_dim = 32
    n_layers = 2
    n_steps = 8

    key = jax.random.PRNGKey(0)
    k_in, k_h, k_c, k_p = jax.random.split(key, 4)
    init = jax.random.normal(k_in, (B, output_dim), dtype=jnp.float32)
    hidden = jax.random.normal(k_h, (n_layers, B, hidden_dim), dtype=jnp.float32)
    cell = jax.random.normal(k_c, (n_layers, B, hidden_dim), dtype=jnp.float32)

    raw = make_raw_params(k_p, output_dim, embedding_dim, hidden_dim)
    kp = pack_params(raw)

    # Pure-JAX f32 references.
    pred_r, h_r, c_r = reference_forward(init, hidden, cell, raw)
    preds_r, hT_r, cT_r = reference_rollout(init, hidden, cell, raw, n_steps)

    # --- single-step path (exact module forward) ---
    pred, h_out, c_out = conditional_seq_decoder(init, hidden, cell, kp, output_dim)
    jax.block_until_ready((pred, h_out, c_out))
    assert np.allclose(np.asarray(pred), np.asarray(pred_r), atol=2e-2)
    assert np.allclose(np.asarray(h_out), np.asarray(h_r), atol=2e-2)
    assert np.allclose(np.asarray(c_out), np.asarray(c_r), atol=2e-2)

    # --- fused multi-step rollout (loop fully inside the kernel) ---
    preds, hT, cT = conditional_seq_decoder_rollout(
        init, hidden, cell, kp, output_dim, n_steps)
    jax.block_until_ready((preds, hT, cT))
    assert np.allclose(np.asarray(preds), np.asarray(preds_r), atol=3e-2)
    assert np.allclose(np.asarray(hT), np.asarray(hT_r), atol=3e-2)
    assert np.allclose(np.asarray(cT), np.asarray(cT_r), atol=3e-2)

    print("KERNEL_OK")
</pallas_src>

<mosaic_0001>
module attributes {stable_mosaic.version = 11 : i64} {
  func.func @rollout_kernel(%arg0: memref<8x128xf32, #tpu.memory_space<vmem>>, %arg1: memref<8x128xf32, #tpu.memory_space<vmem>>, %arg2: memref<160x128xbf16, #tpu.memory_space<vmem>>, %arg3: memref<1x128xf32, #tpu.memory_space<vmem>>, %arg4: memref<32x128xbf16, #tpu.memory_space<vmem>>, %arg5: memref<32x128xbf16, #tpu.memory_space<vmem>>, %arg6: memref<1x128xf32, #tpu.memory_space<vmem>>, %arg7: memref<32x128xbf16, #tpu.memory_space<vmem>>, %arg8: memref<1x128xf32, #tpu.memory_space<vmem>>, %arg9: memref<1x8x128xf32, #tpu.memory_space<vmem>>, %arg10: memref<8x128xf32, #tpu.memory_space<vmem>>) attributes {dimension_semantics = [], scalar_prefetch = 0 : i64, scratch_operands = 0 : i64, tpu.core_type = #tpu.core_type<tc>} {
    %c0 = arith.constant 0 : index
    %c0_0 = arith.constant 0 : index
    %0 = vector.load %arg2[%c0, %c0_0] : memref<160x128xbf16, #tpu.memory_space<vmem>>, vector<160x128xbf16>
    %c0_1 = arith.constant 0 : index
    %c0_2 = arith.constant 0 : index
    %1 = vector.load %arg4[%c0_1, %c0_2] : memref<32x128xbf16, #tpu.memory_space<vmem>>, vector<32x128xbf16>
    %c0_3 = arith.constant 0 : index
    %c0_4 = arith.constant 0 : index
    %2 = vector.load %arg5[%c0_3, %c0_4] : memref<32x128xbf16, #tpu.memory_space<vmem>>, vector<32x128xbf16>
    %c0_5 = arith.constant 0 : index
    %c0_6 = arith.constant 0 : index
    %3 = vector.load %arg7[%c0_5, %c0_6] : memref<32x128xbf16, #tpu.memory_space<vmem>>, vector<32x128xbf16>
    %c0_7 = arith.constant 0 : index
    %c0_8 = arith.constant 0 : index
    %4 = vector.load %arg3[%c0_7, %c0_8] : memref<1x128xf32, #tpu.memory_space<vmem>>, vector<1x128xf32>
    %5 = vector.shape_cast %4 : vector<1x128xf32> to vector<1x128xf32>
    %6 = vector.broadcast %5 : vector<1x128xf32> to vector<8x128xf32>
    %c0_9 = arith.constant 0 : index
    %c0_10 = arith.constant 0 : index
    %7 = vector.load %arg6[%c0_9, %c0_10] : memref<1x128xf32, #tpu.memory_space<vmem>>, vector<1x128xf32>
    %8 = vector.shape_cast %7 : vector<1x128xf32> to vector<1x128xf32>
    %9 = vector.broadcast %8 : vector<1x128xf32> to vector<8x128xf32>
    %c0_11 = arith.constant 0 : index
    %c0_12 = arith.constant 0 : index
    %10 = vector.load %arg8[%c0_11, %c0_12] : memref<1x128xf32, #tpu.memory_space<vmem>>, vector<1x128xf32>
    %11 = vector.shape_cast %10 : vector<1x128xf32> to vector<1x128xf32>
    %12 = vector.broadcast %11 : vector<1x128xf32> to vector<8x128xf32>
    %c0_13 = arith.constant 0 : index
    %c0_14 = arith.constant 0 : index
    %13 = vector.load %arg1[%c0_13, %c0_14] : memref<8x128xf32, #tpu.memory_space<vmem>>, vector<8x128xf32>
    %14 = vector.extract_strided_slice %13 {offsets = [0, 0], sizes = [8, 32], strides = [1, 1]} : vector<8x128xf32> to vector<8x32xf32>
    %15 = vector.extract_strided_slice %13 {offsets = [0, 32], sizes = [8, 32], strides = [1, 1]} : vector<8x128xf32> to vector<8x32xf32>
    %16 = vector.extract_strided_slice %13 {offsets = [0, 64], sizes = [8, 32], strides = [1, 1]} : vector<8x128xf32> to vector<8x32xf32>
    %17 = vector.extract_strided_slice %13 {offsets = [0, 96], sizes = [8, 32], strides = [1, 1]} : vector<8x128xf32> to vector<8x32xf32>
    %c0_15 = arith.constant 0 : index
    %c0_16 = arith.constant 0 : index
    %18 = vector.load %arg0[%c0_15, %c0_16] : memref<8x128xf32, #tpu.memory_space<vmem>>, vector<8x128xf32>
    %19 = arith.truncf %15 : vector<8x32xf32> to vector<8x32xbf16>
    %cst = arith.constant dense<0.000000e+00> : vector<8x128xf32>
    %20 = tpu.matmul %19, %2, %cst {dimension_numbers = #tpu.dot_dimension_numbers<[1], [0], [0], [1], [0, 0, 1, 1], [], []>} : vector<8x32xbf16>, vector<32x128xbf16>, vector<8x128xf32> -> vector<8x128xf32>
    %21 = tpu.concatenate %18, %14 in 1 : vector<8x128xf32>, vector<8x32xf32> -> vector<8x160xf32>
    %22 = arith.truncf %21 : vector<8x160xf32> to vector<8x160xbf16>
    %cst_17 = arith.constant dense<0.000000e+00> : vector<8x128xf32>
    %23 = tpu.matmul %22, %0, %cst_17 {dimension_numbers = #tpu.dot_dimension_numbers<[1], [0], [0], [1], [0, 0, 1, 1], [], []>} : vector<8x160xbf16>, vector<160x128xbf16>, vector<8x128xf32> -> vector<8x128xf32>
    %24 = arith.addf %23, %6 : vector<8x128xf32>
    %25 = arith.negf %24 : vector<8x128xf32>
    %26 = math.exp %25 : vector<8x128xf32>
    %cst_18 = arith.constant 1.000000e+00 : f32
    %27 = vector.broadcast %cst_18 : f32 to vector<8x128xf32>
    %28 = arith.addf %27, %26 : vector<8x128xf32>
    %29 = arith.divf %27, %28 : vector<8x128xf32>
    %30 = math.tanh %24 : vector<8x128xf32>
    %31 = vector.extract_strided_slice %29 {offsets = [0, 0], sizes = [8, 32], strides = [1, 1]} : vector<8x128xf32> to vector<8x32xf32>
    %32 = vector.extract_strided_slice %29 {offsets = [0, 32], sizes = [8, 32], strides = [1, 1]} : vector<8x128xf32> to vector<8x32xf32>
    %33 = vector.extract_strided_slice %30 {offsets = [0, 64], sizes = [8, 32], strides = [1, 1]} : vector<8x128xf32> to vector<8x32xf32>
    %34 = vector.extract_strided_slice %29 {offsets = [0, 96], sizes = [8, 32], strides = [1, 1]} : vector<8x128xf32> to vector<8x32xf32>
    %35 = arith.mulf %32, %16 : vector<8x32xf32>
    %36 = arith.mulf %31, %33 : vector<8x32xf32>
    %37 = arith.addf %35, %36 : vector<8x32xf32>
    %38 = math.tanh %37 : vector<8x32xf32>
    %39 = arith.mulf %34, %38 : vector<8x32xf32>
    %40 = arith.truncf %39 : vector<8x32xf32> to vector<8x32xbf16>
    %cst_19 = arith.constant dense<0.000000e+00> : vector<8x128xf32>
    %41 = tpu.matmul %40, %1, %cst_19 {dimension_numbers = #tpu.dot_dimension_numbers<[1], [0], [0], [1], [0, 0, 1, 1], [], []>} : vector<8x32xbf16>, vector<32x128xbf16>, vector<8x128xf32> -> vector<8x128xf32>
    %42 = arith.addf %41, %20 : vector<8x128xf32>
    %43 = arith.addf %42, %9 : vector<8x128xf32>
    %44 = arith.negf %43 : vector<8x128xf32>
    %45 = math.exp %44 : vector<8x128xf32>
    %cst_20 = arith.constant 1.000000e+00 : f32
    %46 = vector.broadcast %cst_20 : f32 to vector<8x128xf32>
    %47 = arith.addf %46, %45 : vector<8x128xf32>
    %48 = arith.divf %46, %47 : vector<8x128xf32>
    %49 = math.tanh %43 : vector<8x128xf32>
    %50 = vector.extract_strided_slice %48 {offsets = [0, 0], sizes = [8, 32], strides = [1, 1]} : vector<8x128xf32> to vector<8x32xf32>
    %51 = vector.extract_strided_slice %48 {offsets = [0, 32], sizes = [8, 32], strides = [1, 1]} : vector<8x128xf32> to vector<8x32xf32>
    %52 = vector.extract_strided_slice %49 {offsets = [0, 64], sizes = [8, 32], strides = [1, 1]} : vector<8x128xf32> to vector<8x32xf32>
    %53 = vector.extract_strided_slice %48 {offsets = [0, 96], sizes = [8, 32], strides = [1, 1]} : vector<8x128xf32> to vector<8x32xf32>
    %54 = arith.mulf %51, %17 : vector<8x32xf32>
    %55 = arith.mulf %50, %52 : vector<8x32xf32>
    %56 = arith.addf %54, %55 : vector<8x32xf32>
    %57 = math.tanh %56 : vector<8x32xf32>
    %58 = arith.mulf %53, %57 : vector<8x32xf32>
    %59 = arith.truncf %58 : vector<8x32xf32> to vector<8x32xbf16>
    %cst_21 = arith.constant dense<0.000000e+00> : vector<8x128xf32>
    %60 = tpu.matmul %59, %3, %cst_21 {dimension_numbers = #tpu.dot_dimension_numbers<[1], [0], [0], [1], [0, 0, 1, 1], [], []>} : vector<8x32xbf16>, vector<32x128xbf16>, vector<8x128xf32> -> vector<8x128xf32>
    %61 = arith.addf %60, %12 : vector<8x128xf32>
    %c0_22 = arith.constant 0 : index
    %c0_23 = arith.constant 0 : index
    %c0_24 = arith.constant 0 : index
    %62 = vector.load %arg9[%c0_22, %c0_23, %c0_24] : memref<1x8x128xf32, #tpu.memory_space<vmem>>, vector<1x8x128xf32>
    %63 = vector.shape_cast %62 : vector<1x8x128xf32> to vector<8x128xf32>
    %64 = vector.shape_cast %61 : vector<8x128xf32> to vector<1x8x128xf32>
    tpu.vector_store %arg9[%c0_22, %c0_23, %c0_24], %64 {strides = array<i32>} : memref<1x8x128xf32, #tpu.memory_space<vmem>>, vector<1x8x128xf32>,
    %65 = tpu.concatenate %39, %58, %37, %56 in 1 : vector<8x32xf32>, vector<8x32xf32>, vector<8x32xf32>, vector<8x32xf32> -> vector<8x128xf32>
    %c0_25 = arith.constant 0 : index
    %c0_26 = arith.constant 0 : index
    %66 = vector.load %arg10[%c0_25, %c0_26] : memref<8x128xf32, #tpu.memory_space<vmem>>, vector<8x128xf32>
    tpu.vector_store %arg10[%c0_25, %c0_26], %65 {strides = array<i32>} : memref<8x128xf32, #tpu.memory_space<vmem>>, vector<8x128xf32>,
    return
  }
}

</mosaic_0001>

<llo_original>
// kernel: tpu_custom_call.1
$region0: #{tpu_custom_call.1}
  #allocation0 [shape = 'u32[]', space=smem, size = 0x4, offset = 0x4, fixed_abs, tag = 'smem constant byte address 0x4 - core index']
  #allocation1 [shape = 'u32[144,128]{1,0:T(1,128)}', space=vmem, size = 0x12000, scoped, tag = 'internal scratch']
  %s0 = inlined_call_operand.hbm [shape: f32[8,128], index: 0, kind: input, shape index: {}]
  %s1 = inlined_call_operand.hbm [shape: f32[8,128], index: 1, kind: input, shape index: {}]
  %s2 = inlined_call_operand.hbm [shape: bf16[160,128], index: 2, kind: input, shape index: {}]
  %s3 = inlined_call_operand.vmem [shape: f32[1,128], index: 3, kind: input, shape index: {}]
  %s4 = inlined_call_operand.hbm [shape: bf16[32,128], index: 4, kind: input, shape index: {}]
  %s5 = inlined_call_operand.vmem [shape: bf16[32,128], index: 5, kind: input, shape index: {}]
  %s6 = inlined_call_operand.vmem [shape: f32[1,128], index: 6, kind: input, shape index: {}]
  %s7 = inlined_call_operand.hbm [shape: bf16[32,128], index: 7, kind: input, shape index: {}]
  %s8 = inlined_call_operand.vmem [shape: f32[1,128], index: 8, kind: input, shape index: {}]
  %s9 = inlined_call_operand.hbm [shape: f32[1,8,128], index: 9, kind: output, shape index: {0}]
  %s10 = inlined_call_operand.hbm [shape: f32[8,128], index: 10, kind: output, shape index: {1}]
  %11 = xla_tuple %s9, %s10
  %s12 = sld [smem:[#allocation0]]
  $region74: #{tpu_custom_call.1} parent=0
    _
  %s14 = ssub.s32 1, %s12
  %s15 = scalar_select 0, %s14, %s12
  $region1: #{tpu_custom_call.1} parent=0
    #allocation2 [shape = 'u8[4096]{0}', space=vmem, size = 0x1000, scoped, tag = 'input window, operand 0, single buffered']
    #allocation3 [shape = 's32[1]{0}', space=sflag, size = 0x4, scoped, tag = 'scoped memory for tpu_custom_call.1']
    #allocation4 [shape = 's32[1]{0}', space=sflag, size = 0x4, scoped, tag = 'scoped memory for tpu_custom_call.1']
    #allocation5 [shape = 'u8[4096]{0}', space=vmem, size = 0x1000, scoped, tag = 'input window, operand 1, single buffered']
    #allocation6 [shape = 's32[1]{0}', space=sflag, size = 0x4, scoped, tag = 'scoped memory for tpu_custom_call.1']
    #allocation7 [shape = 'u8[40960]{0}', space=vmem, size = 0xa000, scoped, tag = 'input window, operand 2, single buffered']
    #allocation8 [shape = 'u8[8192]{0}', space=vmem, size = 0x2000, scoped, tag = 'input window, operand 4, single buffered']
    #allocation9 [shape = 's32[1]{0}', space=sflag, size = 0x4, scoped, tag = 'scoped memory for tpu_custom_call.1']
    #allocation10 [shape = 'u8[8192]{0}', space=vmem, size = 0x2000, scoped, tag = 'input window, operand 7, single buffered']
    #allocation11 [shape = 'u8[4096]{0}', space=vmem, size = 0x1000, scoped, tag = 'output window, operand 0, single buffered']
    #allocation12 [shape = 'u8[4096]{0}', space=vmem, size = 0x1000, scoped, tag = 'output window, operand 1, single buffered']
    #allocation13 [shape = 's32[1]{0}', space=sflag, size = 0x4, scoped, tag = 'scoped memory for tpu_custom_call.1']
    %16 = vsyncpa [#allocation3], 0
    %17 = vsyncpa [#allocation6], 0
    %18 = vsyncpa [#allocation9], 0
    %19 = vsyncpa [#allocation4], 0
    %20 = vsyncpa [#allocation13], 0
    // Predicated region
    $region2: #{tpu_custom_call.1} parent=1 // pred_check
      _
    $region3: #{tpu_custom_call.1} parent=1 // pred_check_branch
      %22 = sbr.rel (0) target = $region5
    $region4: #{tpu_custom_call.1} parent=1 // pred_region
      %s24 = ssub.s32 128, 128
      %25 = vsyncadd [#allocation3], %s24
      %s27 = sshll.u32 [#allocation2], 4
      %s28 = int_to_ptr.vmem [resolvable:$true] %s27
      %30 = dma.hbm_to_vmem [thread:$0]  %s0, 128, %s28, [#allocation3]
    $region5: #{tpu_custom_call.1} parent=1 // pred_fallthru
      _
    // Predicated region
    $region6: #{tpu_custom_call.1} parent=1 // pred_check
      _
    $region7: #{tpu_custom_call.1} parent=1 // pred_check_branch
      %32 = sbr.rel (0) target = $region9
    $region8: #{tpu_custom_call.1} parent=1 // pred_region
      %s34 = ssub.s32 128, 128
      %35 = vsyncadd [#allocation6], %s34
      %s37 = sshll.u32 [#allocation5], 4
      %s38 = int_to_ptr.vmem [resolvable:$true] %s37
      %40 = dma.hbm_to_vmem [thread:$0]  %s1, 128, %s38, [#allocation6]
    $region9: #{tpu_custom_call.1} parent=1 // pred_fallthru
      _
    // Predicated region
    $region10: #{tpu_custom_call.1} parent=1 // pred_check
      _
    $region11: #{tpu_custom_call.1} parent=1 // pred_check_branch
      %42 = sbr.rel (0) target = $region13
    $region12: #{tpu_custom_call.1} parent=1 // pred_region
      %s44 = ssub.s32 1280, 1280
      %45 = vsyncadd [#allocation6], %s44
      %s46 = sshll.u32 [#allocation7], 4
      %s47 = int_to_ptr.vmem [resolvable:$true] %s46
      %52 = dma.hbm_to_vmem [thread:$0]  %s2, 1280, %s47, [#allocation6], 64, 64, 4
    $region13: #{tpu_custom_call.1} parent=1 // pred_fallthru
      _
    // Predicated region
    $region14: #{tpu_custom_call.1} parent=1 // pred_check
      _
    $region15: #{tpu_custom_call.1} parent=1 // pred_check_branch
      %54 = sbr.rel (0) target = $region17
    $region16: #{tpu_custom_call.1} parent=1 // pred_region
      _
    $region17: #{tpu_custom_call.1} parent=1 // pred_fallthru
      _
    // Predicated region
    $region18: #{tpu_custom_call.1} parent=1 // pred_check
      _
    $region19: #{tpu_custom_call.1} parent=1 // pred_check_branch
      %56 = sbr.rel (0) target = $region21
    $region20: #{tpu_custom_call.1} parent=1 // pred_region
      %s58 = ssub.s32 256, 256
      %59 = vsyncadd [#allocation9], %s58
      %s60 = sshll.u32 [#allocation8], 4
      %s61 = int_to_ptr.vmem [resolvable:$true] %s60
      %66 = dma.hbm_to_vmem [thread:$0]  %s4, 256, %s61, [#allocation9], 64, 64, 4
    $region21: #{tpu_custom_call.1} parent=1 // pred_fallthru
      _
    // Predicated region
    $region22: #{tpu_custom_call.1} parent=1 // pred_check
      _
    $region23: #{tpu_custom_call.1} parent=1 // pred_check_branch
      %68 = sbr.rel (0) target = $region25
    $region24: #{tpu_custom_call.1} parent=1 // pred_region
      _
    $region25: #{tpu_custom_call.1} parent=1 // pred_fallthru
      _
    // Predicated region
    $region26: #{tpu_custom_call.1} parent=1 // pred_check
      _
    $region27: #{tpu_custom_call.1} parent=1 // pred_check_branch
      %70 = sbr.rel (0) target = $region29
    $region28: #{tpu_custom_call.1} parent=1 // pred_region
      _
    $region29: #{tpu_custom_call.1} parent=1 // pred_fallthru
      _
    // Predicated region
    $region30: #{tpu_custom_call.1} parent=1 // pred_check
      _
    $region31: #{tpu_custom_call.1} parent=1 // pred_check_branch
      %72 = sbr.rel (0) target = $region33
    $region32: #{tpu_custom_call.1} parent=1 // pred_region
      %s74 = ssub.s32 256, 256
      %75 = vsyncadd [#allocation9], %s74
      %s76 = sshll.u32 [#allocation10], 4
      %s77 = int_to_ptr.vmem [resolvable:$true] %s76
      %82 = dma.hbm_to_vmem [thread:$0]  %s7, 256, %s77, [#allocation9], 64, 64, 4
    $region33: #{tpu_custom_call.1} parent=1 // pred_fallthru
      _
    // Predicated region
    $region34: #{tpu_custom_call.1} parent=1 // pred_check
      _
    $region35: #{tpu_custom_call.1} parent=1 // pred_check_branch
      %84 = sbr.rel (0) target = $region37
    $region36: #{tpu_custom_call.1} parent=1 // pred_region
      _
    $region37: #{tpu_custom_call.1} parent=1 // pred_fallthru
      _
    // Predicated region
    $region38: #{tpu_custom_call.1} parent=1 // pred_check
      _
    $region39: #{tpu_custom_call.1} parent=1 // pred_check_branch
      %86 = sbr.rel (0) target = $region41
    $region40: #{tpu_custom_call.1} parent=1 // pred_region
      %87 = dma.done [#allocation3], 128
    $region41: #{tpu_custom_call.1} parent=1 // pred_fallthru
      _
    // Predicated region
    $region42: #{tpu_custom_call.1} parent=1 // pred_check
      _
    $region43: #{tpu_custom_call.1} parent=1 // pred_check_branch
      %89 = sbr.rel (0) target = $region45
    $region44: #{tpu_custom_call.1} parent=1 // pred_region
      %90 = dma.done [#allocation6], 128
    $region45: #{tpu_custom_call.1} parent=1 // pred_fallthru
      _
    // Predicated region
    $region46: #{tpu_custom_call.1} parent=1 // pred_check
      _
    $region47: #{tpu_custom_call.1} parent=1 // pred_check_branch
      %92 = sbr.rel (0) target = $region49
    $region48: #{tpu_custom_call.1} parent=1 // pred_region
      %93 = dma.done [#allocation6], 1280
    $region49: #{tpu_custom_call.1} parent=1 // pred_fallthru
      _
    // Predicated region
    $region50: #{tpu_custom_call.1} parent=1 // pred_check
      _
    $region51: #{tpu_custom_call.1} parent=1 // pred_check_branch
      %95 = sbr.rel (0) target = $region53
    $region52: #{tpu_custom_call.1} parent=1 // pred_region
      %96 = dma.done [#allocation9], 256
    $region53: #{tpu_custom_call.1} parent=1 // pred_fallthru
      _
    // Predicated region
    $region54: #{tpu_custom_call.1} parent=1 // pred_check
      _
    $region55: #{tpu_custom_call.1} parent=1 // pred_check_branch
      %98 = sbr.rel (0) target = $region57
    $region56: #{tpu_custom_call.1} parent=1 // pred_region
      %99 = dma.done [#allocation9], 256
    $region57: #{tpu_custom_call.1} parent=1 // pred_fallthru
      _
    %v101 = vld [vmem:[#allocation7] sm:$0xf]
    %v102 = vld [vmem:[#allocation7 + $0x4] sm:$0xf]
    %v103 = vld [vmem:[#allocation7 + $0x8] sm:$0xf]
    %v104 = vld [vmem:[#allocation7 + $0xc] sm:$0xf]
    %v105 = vld [vmem:[#allocation7 + $0x10] sm:$0xf]
    %v106 = vld [vmem:[#allocation7 + $0x14] sm:$0xf]
    %v107 = vld [vmem:[#allocation7 + $0x18] sm:$0xf]
    %v108 = vld [vmem:[#allocation7 + $0x1c] sm:$0xf]
    %v109 = vld [vmem:[#allocation7 + $0x20] sm:$0xf]
    %v110 = vld [vmem:[#allocation7 + $0x24] sm:$0xf]
    %v111 = vld [vmem:[#allocation7 + $0x28] sm:$0xf]
    %v112 = vld [vmem:[#allocation7 + $0x2c] sm:$0xf]
    %v113 = vld [vmem:[#allocation7 + $0x30] sm:$0xf]
    %v114 = vld [vmem:[#allocation7 + $0x34] sm:$0xf]
    %v115 = vld [vmem:[#allocation7 + $0x38] sm:$0xf]
    %v116 = vld [vmem:[#allocation7 + $0x3c] sm:$0xf]
    %v117 = vld [vmem:[#allocation7 + $0x40] sm:$0xf]
    %v118 = vld [vmem:[#allocation7 + $0x44] sm:$0xf]
    %v119 = vld [vmem:[#allocation7 + $0x48] sm:$0xf]
    %v120 = vld [vmem:[#allocation7 + $0x4c] sm:$0xf]
    %v121 = vld [vmem:[#allocation8] sm:$0xf]
    %v122 = vld [vmem:[#allocation8 + $0x4] sm:$0xf]
    %v123 = vld [vmem:[#allocation8 + $0x8] sm:$0xf]
    %v124 = vld [vmem:[#allocation8 + $0xc] sm:$0xf]
    %v125 = vld [vmem:[%s5] sm:$0xf]
    %v126 = vld [vmem:[%s5 + $0x4] sm:$0xf]
    %v127 = vld [vmem:[%s5 + $0x8] sm:$0xf]
    %v128 = vld [vmem:[%s5 + $0xc] sm:$0xf]
    %v129 = vld [vmem:[#allocation10] sm:$0xf]
    %v130 = vld [vmem:[#allocation10 + $0x4] sm:$0xf]
    %v131 = vld [vmem:[#allocation10 + $0x8] sm:$0xf]
    %v132 = vld [vmem:[#allocation10 + $0xc] sm:$0xf]
    %v133 = vld [vmem:[%s3] sm:$0x1]
    %v135 = vlaneseq
    %v136 = vshrl.u32 %v135, 7
    %v137 = vsub.s32 0, %v136
    %v138 = vrot.slane %v133, %v137
    %v140 = vld [vmem:[%s6] sm:$0x1]
    %v142 = vlaneseq
    %v143 = vshrl.u32 %v142, 7
    %v144 = vsub.s32 0, %v143
    %v145 = vrot.slane %v140, %v144
    %v147 = vld [vmem:[%s8] sm:$0x1]
    %v149 = vlaneseq
    %v150 = vshrl.u32 %v149, 7
    %v151 = vsub.s32 0, %v150
    %v152 = vrot.slane %v147, %v151
    %v154 = vld [vmem:[#allocation5] sm:$0xff]
    %v155 = vld [vmem:[#allocation2] sm:$0xff]
    %v156 = vpack.c.bf16 %v154, %v154
    %158 = vrot.lane.b32.xlu0 %v156, 96
    %v159 = vpop.permute.xlu0 %158
    %v164 = vunpack.c.l.b16 %v125
    %v165 = vunpack.c.l.b16 %v126
    %v166 = vunpack.c.l.b16 %v127
    %v167 = vunpack.c.l.b16 %v128
    %v168 = vpack.c.b16 %v165, %v164
    %v169 = vpack.c.b16 %v167, %v166
    %vm172 = vcmask 261120
    %v174 = vsel %vm172, %v159, 0
    %176 = vmatprep.subr.bf16.mxu0 0
    %177 = vmatpush1.bf16.msra.mxu0 %v168
    %178 = vmatprep.subr.bf16.mxu0 0
    %179 = vmatpush1.bf16.msra.mxu0 %v169
    %180 = vmatprep.subr.bf16.mxu0 0
    %181 = vmatpush1.bf16.msra.mxu0 0
    %182 = vmatprep.subr.bf16.mxu0 0
    %183 = vmatpush1.bf16.msra.mxu0 0
    %184 = vmatprep.subr.bf16.mxu0 0
    %185 = vmatpush1.bf16.msra.mxu0 0
    %186 = vmatprep.subr.bf16.mxu0 0
    %187 = vmatpush1.bf16.msra.mxu0 0
    %188 = vmatprep.subr.bf16.mxu0 0
    %189 = vmatpush1.bf16.msra.mxu0 0
    %190 = vmatprep.subr.bf16.mxu0 0
    %191 = vmatpush1.bf16.msra.mxu0 0
    %192 = vmatprep.subr.bf16.mxu0 0
    %193 = vmatpush1.bf16.msra.mxu0 0
    %194 = vmatprep.subr.bf16.mxu0 0
    %195 = vmatpush1.bf16.msra.mxu0 0
    %196 = vmatprep.subr.bf16.mxu0 0
    %197 = vmatpush1.bf16.msra.mxu0 0
    %198 = vmatprep.subr.bf16.mxu0 0
    %199 = vmatpush1.bf16.msra.mxu0 0
    %200 = vmatprep.subr.bf16.mxu0 0
    %201 = vmatpush1.bf16.msra.mxu0 0
    %202 = vmatprep.subr.bf16.mxu0 0
    %203 = vmatpush1.bf16.msra.mxu0 0
    %204 = vmatprep.subr.bf16.mxu0 0
    %205 = vmatpush1.bf16.msra.mxu0 0
    %206 = vmatprep.subr.bf16.mxu0 0
    %207 = vmatpush1.bf16.msra.mxu0 0
    %208 = vmatprep.mubr.bf16.mxu0 0
    %209 = vmatmul.mubr.bf16.gmra.mrb[0].mxu0 %v174
    %v210 = vpop.f32.mrb[0].mxu0
    %v211 = vadd.f32 0.0, %v210
    %v212 = vpop.f32.mrb[0].mxu0
    %v213 = vpop.f32.mrb[0].mxu0
    %v214 = vpop.f32.mrb[0].mxu0
    %215 = vdwg.mxu0
    %v216 = vpack.c.bf16 %v155, %v155
    %v237 = vunpack.c.l.b16 %v101
    %v238 = vunpack.c.l.b16 %v102
    %v239 = vunpack.c.l.b16 %v103
    %v240 = vunpack.c.l.b16 %v104
    %v241 = vunpack.c.l.b16 %v105
    %v242 = vunpack.c.l.b16 %v106
    %v243 = vunpack.c.l.b16 %v107
    %v244 = vunpack.c.l.b16 %v108
    %v245 = vunpack.c.l.b16 %v109
    %v246 = vunpack.c.l.b16 %v110
    %v247 = vunpack.c.l.b16 %v111
    %v248 = vunpack.c.l.b16 %v112
    %v249 = vunpack.c.l.b16 %v113
    %v250 = vunpack.c.l.b16 %v114
    %v251 = vunpack.c.l.b16 %v115
    %v252 = vunpack.c.l.b16 %v116
    %v253 = vunpack.c.l.b16 %v117
    %v254 = vunpack.c.l.b16 %v118
    %v255 = vunpack.c.l.b16 %v119
    %v256 = vunpack.c.l.b16 %v120
    %v257 = vpack.c.b16 %v238, %v237
    %v258 = vpack.c.b16 %v240, %v239
    %v259 = vpack.c.b16 %v242, %v241
    %v260 = vpack.c.b16 %v244, %v243
    %v261 = vpack.c.b16 %v246, %v245
    %v262 = vpack.c.b16 %v248, %v247
    %v263 = vpack.c.b16 %v250, %v249
    %v264 = vpack.c.b16 %v252, %v251
    %v265 = vpack.c.b16 %v254, %v253
    %v266 = vpack.c.b16 %v256, %v255
    %v278 = vsel %vm172, %v156, 0
    %280 = vmatprep.subr.bf16.mxu0 0
    %281 = vmatpush1.bf16.msra.mxu0 %v257
    %282 = vmatprep.subr.bf16.mxu0 0
    %283 = vmatpush1.bf16.msra.mxu0 %v258
    %284 = vmatprep.subr.bf16.mxu0 0
    %285 = vmatpush1.bf16.msra.mxu0 %v259
    %286 = vmatprep.subr.bf16.mxu0 0
    %287 = vmatpush1.bf16.msra.mxu0 %v260
    %288 = vmatprep.subr.bf16.mxu0 0
    %289 = vmatpush1.bf16.msra.mxu0 %v261
    %290 = vmatprep.subr.bf16.mxu0 0
    %291 = vmatpush1.bf16.msra.mxu0 %v262
    %292 = vmatprep.subr.bf16.mxu0 0
    %293 = vmatpush1.bf16.msra.mxu0 %v263
    %294 = vmatprep.subr.bf16.mxu0 0
    %295 = vmatpush1.bf16.msra.mxu0 %v264
    %296 = vmatprep.subr.bf16.mxu0 0
    %297 = vmatpush1.bf16.msra.mxu0 %v265
    %298 = vmatprep.subr.bf16.mxu0 0
    %299 = vmatpush1.bf16.msra.mxu0 %v266
    %300 = vmatprep.subr.bf16.mxu0 0
    %301 = vmatpush1.bf16.msra.mxu0 0
    %302 = vmatprep.subr.bf16.mxu0 0
    %303 = vmatpush1.bf16.msra.mxu0 0
    %304 = vmatprep.subr.bf16.mxu0 0
    %305 = vmatpush1.bf16.msra.mxu0 0
    %306 = vmatprep.subr.bf16.mxu0 0
    %307 = vmatpush1.bf16.msra.mxu0 0
    %308 = vmatprep.subr.bf16.mxu0 0
    %309 = vmatpush1.bf16.msra.mxu0 0
    %310 = vmatprep.subr.bf16.mxu0 0
    %311 = vmatpush1.bf16.msra.mxu0 0
    %312 = vmatprep.mubr.bf16.mxu0 %v278
    %313 = vmatmul.mubr.bf16.gmra.mrb[0].mxu0 %v216
    %v314 = vpop.f32.mrb[0].mxu0
    %v315 = vadd.f32 %v138, %v314
    %v316 = vpop.f32.mrb[0].mxu0
    %v317 = vpop.f32.mrb[0].mxu0
    %v318 = vpop.f32.mrb[0].mxu0
    %319 = vdwg.mxu0
    %v320 = vxor.u32 %v315, 2147483648
    %v321 = vmul.f32 %v320, 1.442695
    %v322 = vpow.pop %v321
    %v323 = vadd.f32 %v322, 1.0
    %v324 = vrcp.pop %v323
    %v325 = vmul.f32 1.0, %v324
    %v326 = vtanh.pop %v315
    %328 = vrot.lane.b32.xlu0 %v154, 96
    %v329 = vpop.permute.xlu0 %328
    %v331 = vmul.f32 %v325, %v329
    %333 = vrot.lane.b32.xlu0 %v326, 64
    %v334 = vpop.permute.xlu0 %333
    %v336 = vmul.f32 %v325, %v334
    %338 = vrot.lane.b32.xlu0 %v336, 32
    %v339 = vpop.permute.xlu0 %338
    %v341 = vadd.f32 %v331, %v339
    %v342 = vtanh.pop %v341
    %344 = vrot.lane.b32.xlu0 %v342, 64
    %v345 = vpop.permute.xlu0 %344
    %v347 = vmul.f32 %v325, %v345
    %v348 = vpack.c.bf16 %v347, %v347
    %350 = vrot.lane.b32.xlu0 %v348, 32
    %v351 = vpop.permute.xlu0 %350
    %v356 = vunpack.c.l.b16 %v121
    %v357 = vunpack.c.l.b16 %v122
    %v358 = vunpack.c.l.b16 %v123
    %v359 = vunpack.c.l.b16 %v124
    %v360 = vpack.c.b16 %v357, %v356
    %v361 = vpack.c.b16 %v359, %v358
    %v365 = vsel %vm172, %v351, 0
    %367 = vmatprep.subr.bf16.mxu0 0
    %368 = vmatpush1.bf16.msra.mxu0 %v360
    %369 = vmatprep.subr.bf16.mxu0 0
    %370 = vmatpush1.bf16.msra.mxu0 %v361
    %371 = vmatprep.subr.bf16.mxu0 0
    %372 = vmatpush1.bf16.msra.mxu0 0
    %373 = vmatprep.subr.bf16.mxu0 0
    %374 = vmatpush1.bf16.msra.mxu0 0
    %375 = vmatprep.subr.bf16.mxu0 0
    %376 = vmatpush1.bf16.msra.mxu0 0
    %377 = vmatprep.subr.bf16.mxu0 0
    %378 = vmatpush1.bf16.msra.mxu0 0
    %379 = vmatprep.subr.bf16.mxu0 0
    %380 = vmatpush1.bf16.msra.mxu0 0
    %381 = vmatprep.subr.bf16.mxu0 0
    %382 = vmatpush1.bf16.msra.mxu0 0
    %383 = vmatprep.subr.bf16.mxu0 0
    %384 = vmatpush1.bf16.msra.mxu0 0
    %385 = vmatprep.subr.bf16.mxu0 0
    %386 = vmatpush1.bf16.msra.mxu0 0
    %387 = vmatprep.subr.bf16.mxu0 0
    %388 = vmatpush1.bf16.msra.mxu0 0
    %389 = vmatprep.subr.bf16.mxu0 0
    %390 = vmatpush1.bf16.msra.mxu0 0
    %391 = vmatprep.subr.bf16.mxu0 0
    %392 = vmatpush1.bf16.msra.mxu0 0
    %393 = vmatprep.subr.bf16.mxu0 0
    %394 = vmatpush1.bf16.msra.mxu0 0
    %395 = vmatprep.subr.bf16.mxu0 0
    %396 = vmatpush1.bf16.msra.mxu0 0
    %397 = vmatprep.subr.bf16.mxu0 0
    %398 = vmatpush1.bf16.msra.mxu0 0
    %399 = vmatprep.mubr.bf16.mxu0 0
    %400 = vmatmul.mubr.bf16.gmra.mrb[0].mxu0 %v365
    %v401 = vpop.f32.mrb[0].mxu0
    %v402 = vadd.f32 %v211, %v401
    %v403 = vpop.f32.mrb[0].mxu0
    %v404 = vpop.f32.mrb[0].mxu0
    %v405 = vpop.f32.mrb[0].mxu0
    %406 = vdwg.mxu0
    %v407 = vadd.f32 %v402, %v145
    %v408 = vxor.u32 %v407, 2147483648
    %v409 = vmul.f32 %v408, 1.442695
    %v410 = vpow.pop %v409
    %v411 = vadd.f32 %v410, 1.0
    %v412 = vrcp.pop %v411
    %v413 = vmul.f32 1.0, %v412
    %v414 = vtanh.pop %v407
    %415 = vrot.lane.b32.xlu0 %v154, 64
    %v416 = vpop.permute.xlu0 %415
    %v418 = vmul.f32 %v413, %v416
    %420 = vrot.lane.b32.xlu0 %v414, 64
    %v421 = vpop.permute.xlu0 %420
    %v423 = vmul.f32 %v413, %v421
    %425 = vrot.lane.b32.xlu0 %v423, 32
    %v426 = vpop.permute.xlu0 %425
    %v428 = vadd.f32 %v418, %v426
    %v429 = vtanh.pop %v428
    %431 = vrot.lane.b32.xlu0 %v429, 64
    %v432 = vpop.permute.xlu0 %431
    %v434 = vmul.f32 %v413, %v432
    %v435 = vpack.c.bf16 %v434, %v434
    %437 = vrot.lane.b32.xlu0 %v435, 32
    %v438 = vpop.permute.xlu0 %437
    %v443 = vunpack.c.l.b16 %v129
    %v444 = vunpack.c.l.b16 %v130
    %v445 = vunpack.c.l.b16 %v131
    %v446 = vunpack.c.l.b16 %v132
    %v447 = vpack.c.b16 %v444, %v443
    %v448 = vpack.c.b16 %v446, %v445
    %v452 = vsel %vm172, %v438, 0
    %454 = vmatprep.subr.bf16.mxu0 0
    %455 = vmatpush1.bf16.msra.mxu0 %v447
    %456 = vmatprep.subr.bf16.mxu0 0
    %457 = vmatpush1.bf16.msra.mxu0 %v448
    %458 = vmatprep.subr.bf16.mxu0 0
    %459 = vmatpush1.bf16.msra.mxu0 0
    %460 = vmatprep.subr.bf16.mxu0 0
    %461 = vmatpush1.bf16.msra.mxu0 0
    %462 = vmatprep.subr.bf16.mxu0 0
    %463 = vmatpush1.bf16.msra.mxu0 0
    %464 = vmatprep.subr.bf16.mxu0 0
    %465 = vmatpush1.bf16.msra.mxu0 0
    %466 = vmatprep.subr.bf16.mxu0 0
    %467 = vmatpush1.bf16.msra.mxu0 0
    %468 = vmatprep.subr.bf16.mxu0 0
    %469 = vmatpush1.bf16.msra.mxu0 0
    %470 = vmatprep.subr.bf16.mxu0 0
    %471 = vmatpush1.bf16.msra.mxu0 0
    %472 = vmatprep.subr.bf16.mxu0 0
    %473 = vmatpush1.bf16.msra.mxu0 0
    %474 = vmatprep.subr.bf16.mxu0 0
    %475 = vmatpush1.bf16.msra.mxu0 0
    %476 = vmatprep.subr.bf16.mxu0 0
    %477 = vmatpush1.bf16.msra.mxu0 0
    %478 = vmatprep.subr.bf16.mxu0 0
    %479 = vmatpush1.bf16.msra.mxu0 0
    %480 = vmatprep.subr.bf16.mxu0 0
    %481 = vmatpush1.bf16.msra.mxu0 0
    %482 = vmatprep.subr.bf16.mxu0 0
    %483 = vmatpush1.bf16.msra.mxu0 0
    %484 = vmatprep.subr.bf16.mxu0 0
    %485 = vmatpush1.bf16.msra.mxu0 0
    %486 = vmatprep.mubr.bf16.mxu0 0
    %487 = vmatmul.mubr.bf16.gmra.mrb[0].mxu0 %v452
    %v488 = vpop.f32.mrb[0].mxu0
    %v489 = vadd.f32 %v152, %v488
    %v490 = vpop.f32.mrb[0].mxu0
    %v491 = vpop.f32.mrb[0].mxu0
    %v492 = vpop.f32.mrb[0].mxu0
    %493 = vdwg.mxu0
    %494 = vst [vmem:[#allocation11] sm:$0xff] %v489
    %496 = vrot.lane.b32.xlu0 %v347, 32
    %v497 = vpop.permute.xlu0 %496
    %500 = vrot.lane.b32.xlu0 %v434, 64
    %v501 = vpop.permute.xlu0 %500
    %504 = vrot.lane.b32.xlu0 %v341, 32
    %v505 = vpop.permute.xlu0 %504
    %508 = vrot.lane.b32.xlu0 %v428, 64
    %v509 = vpop.permute.xlu0 %508
    %v511 = vsel %vm172, %v497, %v501
    %vm512 = vcmask 523264
    %v513 = vsel %vm512, %v511, %v505
    %vm514 = vcmask 785408
    %v515 = vsel %vm514, %v513, %v509
    %516 = vst [vmem:[#allocation12] sm:$0xff] %v515
    // Predicated region
    $region58: #{tpu_custom_call.1} parent=1 // pred_check
      _
    $region59: #{tpu_custom_call.1} parent=1 // pred_check_branch
      %518 = sbr.rel (0) target = $region61
    $region60: #{tpu_custom_call.1} parent=1 // pred_region
      %s520 = ssub.s32 128, 128
      %521 = vsyncadd [#allocation4], %s520
      %s523 = sshll.u32 [#allocation11], 4
      %s524 = int_to_ptr.vmem [resolvable:$true] %s523
      %526 = dma.vmem_to_hbm [thread:$0]  %s524, 128, %s9, [#allocation4]
    $region61: #{tpu_custom_call.1} parent=1 // pred_fallthru
      _
    // Predicated region
    $region62: #{tpu_custom_call.1} parent=1 // pred_check
      _
    $region63: #{tpu_custom_call.1} parent=1 // pred_check_branch
      %528 = sbr.rel (0) target = $region65
    $region64: #{tpu_custom_call.1} parent=1 // pred_region
      %s530 = ssub.s32 128, 128
      %531 = vsyncadd [#allocation13], %s530
      %s533 = sshll.u32 [#allocation12], 4
      %s534 = int_to_ptr.vmem [resolvable:$true] %s533
      %536 = dma.vmem_to_hbm [thread:$0]  %s534, 128, %s10, [#allocation13]
    $region65: #{tpu_custom_call.1} parent=1 // pred_fallthru
      _
    // Predicated region
    $region66: #{tpu_custom_call.1} parent=1 // pred_check
      _
    $region67: #{tpu_custom_call.1} parent=1 // pred_check_branch
      %538 = sbr.rel (0) target = $region69
    $region68: #{tpu_custom_call.1} parent=1 // pred_region
      %539 = dma.done [#allocation4], 128
    $region69: #{tpu_custom_call.1} parent=1 // pred_fallthru
      _
    // Predicated region
    $region70: #{tpu_custom_call.1} parent=1 // pred_check
      _
    $region71: #{tpu_custom_call.1} parent=1 // pred_check_branch
      %541 = sbr.rel (0) target = $region73
    $region72: #{tpu_custom_call.1} parent=1 // pred_region
      %542 = dma.done [#allocation13], 128
    $region73: #{tpu_custom_call.1} parent=1 // pred_fallthru
      _
    %543 = vsyncpa [#allocation3], 1
    %544 = vsyncpa [#allocation6], 1
    %545 = vsyncpa [#allocation9], 1
    %546 = vsyncpa [#allocation4], 1
    %547 = vsyncpa [#allocation13], 1

</llo_original>
